<compile_context>
chip_gen: v5e
topology: v5e:2x2
jax: 0.10.0
libtpu: 0.0.40
codegen_flags: <defaults>
</compile_context>

<pallas_src>
import functools
import math

import jax
import jax.numpy as jnp
from jax import lax
from jax.experimental import pallas as pl
from jax.experimental.pallas import tpu as pltpu

EPS = 1e-12  # F.normalize default eps


def _l2_normalize(x):
    # F.normalize(x, p=2, dim=-1) == x / max(||x||_2, eps)
    #                             == x * rsqrt(max(sum(x*x), eps^2))
    sq = jnp.sum(x * x, axis=-1, keepdims=True)
    return x * lax.rsqrt(jnp.maximum(sq, EPS * EPS))


def _round_up(x, m):
    return (x + m - 1) // m * m


def _transd_kernel(bh_ref, bt_ref, br_ref,        # scalar prefetch (SMEM index streams)
                   ent_ref, rel_ref,              # packed tables, raw HBM refs (pl.ANY)
                   out_ref,                       # (TB, 1) score block
                   h_buf, t_buf, r_buf, sem,      # VMEM (2, TB, 2D) x3 + DMA sems (3, 2)
                   *, p_norm, norm_flag, tb, batch, d):
    i = pl.program_id(0)
    nt = pl.num_programs(0)
    slot = i % 2

    def issue(tile, s):
        base = tile * tb
        rows = jnp.minimum(tb, batch - base)      # skip DMAs for padded rows

        @pl.loop(0, rows)
        def _(j):
            hi = bh_ref[base + j]
            ti = bt_ref[base + j]
            ri = br_ref[base + j]
            pltpu.make_async_copy(ent_ref.at[pl.ds(hi, 1)],
                                  h_buf.at[s, pl.ds(j, 1)], sem.at[0, s]).start()
            pltpu.make_async_copy(ent_ref.at[pl.ds(ti, 1)],
                                  t_buf.at[s, pl.ds(j, 1)], sem.at[1, s]).start()
            pltpu.make_async_copy(rel_ref.at[pl.ds(ri, 1)],
                                  r_buf.at[s, pl.ds(j, 1)], sem.at[2, s]).start()

    def wait(tile, s):
        base = tile * tb
        rows = jnp.minimum(tb, batch - base)

        @pl.loop(0, rows)
        def _(j):
            # Wait descriptors only need matching size + semaphore.
            pltpu.make_async_copy(ent_ref.at[pl.ds(0, 1)],
                                  h_buf.at[s, pl.ds(j, 1)], sem.at[0, s]).wait()
            pltpu.make_async_copy(ent_ref.at[pl.ds(0, 1)],
                                  t_buf.at[s, pl.ds(j, 1)], sem.at[1, s]).wait()
            pltpu.make_async_copy(rel_ref.at[pl.ds(0, 1)],
                                  r_buf.at[s, pl.ds(j, 1)], sem.at[2, s]).wait()

    # Prime the pipeline with tile 0 (slot == 0 when i == 0).
    @pl.when(i == 0)
    def _prime():
        issue(0, slot)

    # Wait for this tile's gathers, then kick off next tile's gathers so they
    # overlap with this tile's compute.
    wait(i, slot)

    @pl.when(i + 1 < nt)
    def _prefetch():
        issue(i + 1, 1 - slot)

    hb = h_buf[slot]                               # (TB, 2D) f32
    tb_v = t_buf[slot]
    rb = r_buf[slot]
    h, ht = hb[:, :d], hb[:, d:]
    t, tt = tb_v[:, :d], tb_v[:, d:]
    r, rt = rb[:, :d], rb[:, d:]

    # _transfer(e, e_transfer, r_transfer) with dim_e == dim_r (_resize is identity):
    #   normalize(e + sum(e * e_transfer, -1, keepdim=True) * r_transfer, p=2, dim=-1)
    h_proj = _l2_normalize(h + jnp.sum(h * ht, axis=-1, keepdims=True) * rt)
    t_proj = _l2_normalize(t + jnp.sum(t * tt, axis=-1, keepdims=True) * rt)

    # _calc(h, t, r, mode='normal'); re-normalizing h_proj / t_proj under norm_flag
    # is idempotent (already unit vectors) -> dropped; only r needs it.
    if norm_flag:
        r = _l2_normalize(r)

    diff = h_proj + r - t_proj
    if p_norm == 1:
        score = jnp.sum(jnp.abs(diff), axis=-1, keepdims=True)        # (TB, 1)
    else:
        score = jnp.sqrt(jnp.sum(diff * diff, axis=-1, keepdims=True))

    out_ref[...] = score.astype(out_ref.dtype)


def transd_forward(ent_emb, rel_emb, ent_tr, rel_tr,
                   batch_h, batch_t, batch_r,
                   *, p_norm=1, norm_flag=True, tile_b=256):
    """TransD forward (mode='normal', margin=None -> raw score of shape [B]).

    Only dim_e == dim_r and p_norm in {1, 2} are supported (the common TransD config).
    """
    D = int(ent_emb.shape[-1])
    assert rel_emb.shape[-1] == D, "kernel assumes dim_e == dim_r (so _resize is identity)"
    assert p_norm in (1, 2), "kernel supports p_norm in {1, 2}"
    B = int(batch_h.shape[0])

    # Interleave each embedding table with its transfer table so a single row DMA
    # fetches both e and e_transfer for an index (3 gathers/row instead of 6).
    # TODO(synk): in a training loop, store the parameters in this packed [N, 2D]
    # layout instead of re-concatenating every forward call.
    ent_packed = jnp.concatenate(
        [ent_emb.astype(jnp.float32), ent_tr.astype(jnp.float32)], axis=-1)   # (Ne, 2D)
    rel_packed = jnp.concatenate(
        [rel_emb.astype(jnp.float32), rel_tr.astype(jnp.float32)], axis=-1)   # (Nr, 2D)

    # Tile size: large enough to amortize per-grid-step overhead, small enough that
    # the three double-buffered (TB, 2D) f32 gather buffers stay well inside VMEM
    # (v7x scoped default is 32 MiB; v5e/v6e have more headroom).
    vmem_budget = 24 << 20
    tb_cap = max(128, (vmem_budget // (48 * D)) // 128 * 128)
    tb = min(tile_b, tb_cap)
    if B <= tb:
        TB = _round_up(max(B, 1), 8)   # single tile
    else:
        TB = tb
    B_pad = _round_up(B, TB)
    num_tiles = B_pad // TB

    bh = batch_h.astype(jnp.int32)
    bt = batch_t.astype(jnp.int32)
    br = batch_r.astype(jnp.int32)

    grid_spec = pltpu.PrefetchScalarGridSpec(
        num_scalar_prefetch=3,
        grid=(num_tiles,),
        in_specs=[pl.BlockSpec(memory_space=pl.ANY),     # packed entity table (HBM)
                  pl.BlockSpec(memory_space=pl.ANY)],    # packed relation table (HBM)
        out_specs=pl.BlockSpec((TB, 1), lambda i, bh, bt, br: (i, 0)),
        scratch_shapes=[pltpu.VMEM((2, TB, 2 * D), jnp.float32),   # h rows (double-buffered)
                        pltpu.VMEM((2, TB, 2 * D), jnp.float32),   # t rows
                        pltpu.VMEM((2, TB, 2 * D), jnp.float32),   # r rows
                        pltpu.SemaphoreType.DMA((3, 2))],
    )

    kern = functools.partial(_transd_kernel, p_norm=p_norm, norm_flag=norm_flag,
                             tb=TB, batch=B, d=D)

    score = pl.pallas_call(
        kern,
        grid_spec=grid_spec,
        out_shape=jax.ShapeDtypeStruct((B_pad, 1), jnp.float32),
        compiler_params=pltpu.CompilerParams(
            # The double-buffered gather scratch / semaphores carry state across
            # grid steps, so the batch axis must run sequentially.
            # TODO(synk): for v7x megacore, split the batch across the two
            # TensorCores at a higher level (two pallas_calls / leading core axis).
            dimension_semantics=("arbitrary",)),
    )(bh, bt, br, ent_packed, rel_packed)

    return score[:B, 0]   # .flatten() of the [B] scores

    # TODO(synk): 'head_batch'/'tail_batch' view reshaping, the margin_flag branch and
    # the predict()/result.txt file side effects are host-side glue, not kernel work.


def _xavier_uniform(key, shape):
    fan_out, fan_in = shape
    bound = math.sqrt(6.0 / (fan_in + fan_out))
    return jax.random.uniform(key, shape, jnp.float32, -bound, bound)


def transd_reference(ent_emb, rel_emb, ent_tr, rel_tr,
                     batch_h, batch_t, batch_r,
                     *, p_norm=1, norm_flag=True):
    """Pure-JAX reference mirroring the PyTorch forward (mode='normal')."""
    def norm(x):
        n = jnp.sqrt(jnp.sum(x * x, -1, keepdims=True))
        return x / jnp.maximum(n, EPS)

    h = jnp.take(ent_emb, batch_h, axis=0)
    t = jnp.take(ent_emb, batch_t, axis=0)
    r = jnp.take(rel_emb, batch_r, axis=0)
    ht = jnp.take(ent_tr, batch_h, axis=0)
    tt = jnp.take(ent_tr, batch_t, axis=0)
    rt = jnp.take(rel_tr, batch_r, axis=0)
    h = norm(h + jnp.sum(h * ht, -1, keepdims=True) * rt)
    t = norm(t + jnp.sum(t * tt, -1, keepdims=True) * rt)
    if norm_flag:
        h, r, t = norm(h), norm(r), norm(t)
    diff = h + r - t
    if p_norm == 1:
        return jnp.sum(jnp.abs(diff), -1)
    return jnp.sqrt(jnp.sum(diff * diff, -1))


if __name__ == "__main__":
    # Small deterministic setup (margin=None, epsilon=None -> xavier init, raw score).
    ent_tot, rel_tot = 40, 12
    dim_e = dim_r = 128   # lane-aligned embedding dim
    B = 8

    key = jax.random.PRNGKey(0)
    k0, k1, k2, k3, k4, k5, k6 = jax.random.split(key, 7)

    ent_embeddings = _xavier_uniform(k0, (ent_tot, dim_e))
    rel_embeddings = _xavier_uniform(k1, (rel_tot, dim_r))
    ent_transfer = _xavier_uniform(k2, (ent_tot, dim_e))
    rel_transfer = _xavier_uniform(k3, (rel_tot, dim_r))

    batch_h = jax.random.randint(k4, (B,), 0, ent_tot)
    batch_t = jax.random.randint(k5, (B,), 0, ent_tot)
    batch_r = jax.random.randint(k6, (B,), 0, rel_tot)

    score = transd_forward(ent_embeddings, rel_embeddings,
                           ent_transfer, rel_transfer,
                           batch_h, batch_t, batch_r,
                           p_norm=1, norm_flag=True)
    score = jax.block_until_ready(score)

    ref = transd_reference(ent_embeddings, rel_embeddings,
                           ent_transfer, rel_transfer,
                           batch_h, batch_t, batch_r,
                           p_norm=1, norm_flag=True)
    assert score.shape == (B,), score.shape
    assert jnp.allclose(score, ref, atol=1e-5, rtol=1e-5), (score, ref)

    print("KERNEL_OK")
</pallas_src>

<mosaic_0001>
module attributes {stable_mosaic.version = 11 : i64} {
  func.func @_transd_kernel(%arg0: i32, %arg1: memref<8xi32, #tpu.memory_space<smem>>, %arg2: memref<8xi32, #tpu.memory_space<smem>>, %arg3: memref<8xi32, #tpu.memory_space<smem>>, %arg4: memref<40x256xf32, #tpu.memory_space<any>>, %arg5: memref<12x256xf32, #tpu.memory_space<any>>, %arg6: memref<8x1xf32, #tpu.memory_space<vmem>>, %arg7: memref<2x8x256xf32, #tpu.memory_space<vmem>>, %arg8: memref<2x8x256xf32, #tpu.memory_space<vmem>>, %arg9: memref<2x8x256xf32, #tpu.memory_space<vmem>>, %arg10: memref<3x2x!tpu.dma_semaphore, #tpu.memory_space<semaphore_mem>>) attributes {dimension_semantics = [#tpu.dimension_semantics<arbitrary>], iteration_bounds = array<i64: 1>, scalar_prefetch = 3 : i64, scratch_operands = 4 : i64, tpu.core_type = #tpu.core_type<tc>, window_params = [{}, {}, {transform_indices = @transform_2, window_bounds = array<i64: 8, 1>}]} {
    %c2_i32 = arith.constant 2 : i32
    %c0_i32 = arith.constant 0 : i32
    %0 = arith.cmpi eq, %c2_i32, %c0_i32 : i32
    %c1_i32 = arith.constant 1 : i32
    %1 = arith.select %0, %c1_i32, %c2_i32 : i32
    %2 = arith.remsi %arg0, %1 : i32
    %c0_i32_0 = arith.constant 0 : i32
    %3 = arith.cmpi ne, %2, %c0_i32_0 : i32
    %c0_i32_1 = arith.constant 0 : i32
    %4 = arith.cmpi slt, %2, %c0_i32_1 : i32
    %c0_i32_2 = arith.constant 0 : i32
    %5 = arith.cmpi slt, %1, %c0_i32_2 : i32
    %6 = arith.xori %4, %5 : i1
    %7 = arith.andi %6, %3 : i1
    %8 = arith.addi %2, %1 : i32
    %9 = arith.select %7, %8, %2 : i32
    %c0_i32_3 = arith.constant 0 : i32
    %10 = arith.cmpi eq, %arg0, %c0_i32_3 : i32
    %11 = arith.extui %10 : i1 to i32
    %c0_i32_4 = arith.constant 0 : i32
    %12 = arith.cmpi ne, %11, %c0_i32_4 : i32
    scf.if %12 {
      %c8_i32_33 = arith.constant 8 : i32
      %c8_i32_34 = arith.constant 8 : i32
      %83 = arith.minsi %c8_i32_33, %c8_i32_34 : i32
      %c0_i32_35 = arith.constant 0 : i32
      %84 = arith.subi %83, %c0_i32_35 : i32
      %c1_i32_36 = arith.constant 1 : i32
      %c1_i32_37 = arith.constant 1 : i32
      %85 = arith.subi %c1_i32_36, %c1_i32_37 : i32
      %86 = arith.addi %84, %85 : i32
      %c1_i32_38 = arith.constant 1 : i32
      %87 = arith.divsi %86, %c1_i32_38 : i32
      %c1_i32_39 = arith.constant 1 : i32
      %c0_i32_40 = arith.constant 0 : i32
      %c0_i32_41 = arith.constant 0 : i32
      %88 = arith.subi %87, %c0_i32_41 : i32
      %89 = arith.addi %c0_i32_41, %88 : i32
      %c1_i32_42 = arith.constant 1 : i32
      scf.for %arg11 = %c0_i32_41 to %89 step %c1_i32_42  : i32 {
        %90 = arith.muli %arg11, %c1_i32_39 : i32
        %91 = arith.addi %c0_i32_40, %90 : i32
        %c0_i32_43 = arith.constant 0 : i32
        %92 = arith.addi %c0_i32_43, %91 : i32
        %93 = arith.index_cast %92 : i32 to index
        %94 = memref.load %arg1[%93] : memref<8xi32, #tpu.memory_space<smem>>
        %c0_i32_44 = arith.constant 0 : i32
        %95 = arith.addi %c0_i32_44, %91 : i32
        %96 = arith.index_cast %95 : i32 to index
        %97 = memref.load %arg2[%96] : memref<8xi32, #tpu.memory_space<smem>>
        %c0_i32_45 = arith.constant 0 : i32
        %98 = arith.addi %c0_i32_45, %91 : i32
        %99 = arith.index_cast %98 : i32 to index
        %100 = memref.load %arg3[%99] : memref<8xi32, #tpu.memory_space<smem>>
        %c0_i32_46 = arith.constant 0 : i32
        %c0_i32_47 = arith.constant 0 : i32
        %101 = tpu.memref_slice %arg4[%94, %c0_i32_47] : memref<40x256xf32, #tpu.memory_space<any>> -> memref<1x256xf32, #tpu.memory_space<any>>
        %c0_i32_48 = arith.constant 0 : i32
        %102 = tpu.memref_slice %arg7[%9, %91, %c0_i32_48] : memref<2x8x256xf32, #tpu.memory_space<vmem>> -> memref<1x1x256xf32, #tpu.memory_space<vmem>>
        %103 = tpu.memref_squeeze %102 : memref<1x1x256xf32, #tpu.memory_space<vmem>> -> memref<1x256xf32, #tpu.memory_space<vmem>>
        %104 = tpu.memref_slice %arg10[%c0_i32_46, %9] : memref<3x2x!tpu.dma_semaphore, #tpu.memory_space<semaphore_mem>> -> memref<1x1x!tpu.dma_semaphore, #tpu.memory_space<semaphore_mem>>
        %105 = tpu.memref_squeeze %104 : memref<1x1x!tpu.dma_semaphore, #tpu.memory_space<semaphore_mem>> -> memref<!tpu.dma_semaphore, #tpu.memory_space<semaphore_mem>>
        tpu.enqueue_dma source(%101 : memref<1x256xf32, #tpu.memory_space<any>>) target(%103 : memref<1x256xf32, #tpu.memory_space<vmem>>) target_semaphore(%105 : memref<!tpu.dma_semaphore, #tpu.memory_space<semaphore_mem>>)
        %c1_i32_49 = arith.constant 1 : i32
        %c0_i32_50 = arith.constant 0 : i32
        %106 = tpu.memref_slice %arg4[%97, %c0_i32_50] : memref<40x256xf32, #tpu.memory_space<any>> -> memref<1x256xf32, #tpu.memory_space<any>>
        %c0_i32_51 = arith.constant 0 : i32
        %107 = tpu.memref_slice %arg8[%9, %91, %c0_i32_51] : memref<2x8x256xf32, #tpu.memory_space<vmem>> -> memref<1x1x256xf32, #tpu.memory_space<vmem>>
        %108 = tpu.memref_squeeze %107 : memref<1x1x256xf32, #tpu.memory_space<vmem>> -> memref<1x256xf32, #tpu.memory_space<vmem>>
        %109 = tpu.memref_slice %arg10[%c1_i32_49, %9] : memref<3x2x!tpu.dma_semaphore, #tpu.memory_space<semaphore_mem>> -> memref<1x1x!tpu.dma_semaphore, #tpu.memory_space<semaphore_mem>>
        %110 = tpu.memref_squeeze %109 : memref<1x1x!tpu.dma_semaphore, #tpu.memory_space<semaphore_mem>> -> memref<!tpu.dma_semaphore, #tpu.memory_space<semaphore_mem>>
        tpu.enqueue_dma source(%106 : memref<1x256xf32, #tpu.memory_space<any>>) target(%108 : memref<1x256xf32, #tpu.memory_space<vmem>>) target_semaphore(%110 : memref<!tpu.dma_semaphore, #tpu.memory_space<semaphore_mem>>)
        %c2_i32_52 = arith.constant 2 : i32
        %c0_i32_53 = arith.constant 0 : i32
        %111 = tpu.memref_slice %arg5[%100, %c0_i32_53] : memref<12x256xf32, #tpu.memory_space<any>> -> memref<1x256xf32, #tpu.memory_space<any>>
        %c0_i32_54 = arith.constant 0 : i32
        %112 = tpu.memref_slice %arg9[%9, %91, %c0_i32_54] : memref<2x8x256xf32, #tpu.memory_space<vmem>> -> memref<1x1x256xf32, #tpu.memory_space<vmem>>
        %113 = tpu.memref_squeeze %112 : memref<1x1x256xf32, #tpu.memory_space<vmem>> -> memref<1x256xf32, #tpu.memory_space<vmem>>
        %114 = tpu.memref_slice %arg10[%c2_i32_52, %9] : memref<3x2x!tpu.dma_semaphore, #tpu.memory_space<semaphore_mem>> -> memref<1x1x!tpu.dma_semaphore, #tpu.memory_space<semaphore_mem>>
        %115 = tpu.memref_squeeze %114 : memref<1x1x!tpu.dma_semaphore, #tpu.memory_space<semaphore_mem>> -> memref<!tpu.dma_semaphore, #tpu.memory_space<semaphore_mem>>
        tpu.enqueue_dma source(%111 : memref<1x256xf32, #tpu.memory_space<any>>) target(%113 : memref<1x256xf32, #tpu.memory_space<vmem>>) target_semaphore(%115 : memref<!tpu.dma_semaphore, #tpu.memory_space<semaphore_mem>>)
      }
    } else {
    }
    %c8_i32 = arith.constant 8 : i32
    %13 = arith.muli %arg0, %c8_i32 : i32
    %c8_i32_5 = arith.constant 8 : i32
    %14 = arith.subi %c8_i32_5, %13 : i32
    %c8_i32_6 = arith.constant 8 : i32
    %15 = arith.minsi %c8_i32_6, %14 : i32
    %c0_i32_7 = arith.constant 0 : i32
    %16 = arith.subi %15, %c0_i32_7 : i32
    %c1_i32_8 = arith.constant 1 : i32
    %c1_i32_9 = arith.constant 1 : i32
    %17 = arith.subi %c1_i32_8, %c1_i32_9 : i32
    %18 = arith.addi %16, %17 : i32
    %c1_i32_10 = arith.constant 1 : i32
    %19 = arith.divsi %18, %c1_i32_10 : i32
    %c1_i32_11 = arith.constant 1 : i32
    %c0_i32_12 = arith.constant 0 : i32
    %c0_i32_13 = arith.constant 0 : i32
    %20 = arith.subi %19, %c0_i32_13 : i32
    %21 = arith.addi %c0_i32_13, %20 : i32
    %c1_i32_14 = arith.constant 1 : i32
    scf.for %arg11 = %c0_i32_13 to %21 step %c1_i32_14  : i32 {
      %83 = arith.muli %arg11, %c1_i32_11 : i32
      %84 = arith.addi %c0_i32_12, %83 : i32
      %c0_i32_33 = arith.constant 0 : i32
      %c0_i32_34 = arith.constant 0 : i32
      %c0_i32_35 = arith.constant 0 : i32
      %85 = tpu.memref_slice %arg4[%c0_i32_34, %c0_i32_35] : memref<40x256xf32, #tpu.memory_space<any>> -> memref<1x256xf32, #tpu.memory_space<any>>
      %c0_i32_36 = arith.constant 0 : i32
      %86 = tpu.memref_slice %arg7[%9, %84, %c0_i32_36] : memref<2x8x256xf32, #tpu.memory_space<vmem>> -> memref<1x1x256xf32, #tpu.memory_space<vmem>>
      %87 = tpu.memref_squeeze %86 : memref<1x1x256xf32, #tpu.memory_space<vmem>> -> memref<1x256xf32, #tpu.memory_space<vmem>>
      %88 = tpu.memref_slice %arg10[%c0_i32_33, %9] : memref<3x2x!tpu.dma_semaphore, #tpu.memory_space<semaphore_mem>> -> memref<1x1x!tpu.dma_semaphore, #tpu.memory_space<semaphore_mem>>
      %89 = tpu.memref_squeeze %88 : memref<1x1x!tpu.dma_semaphore, #tpu.memory_space<semaphore_mem>> -> memref<!tpu.dma_semaphore, #tpu.memory_space<semaphore_mem>>
      tpu.wait_dma2 semaphore(%89 : memref<!tpu.dma_semaphore, #tpu.memory_space<semaphore_mem>>) src(%85 : memref<1x256xf32, #tpu.memory_space<any>>) dst(%87 : memref<1x256xf32, #tpu.memory_space<vmem>>)
      %c1_i32_37 = arith.constant 1 : i32
      %c0_i32_38 = arith.constant 0 : i32
      %c0_i32_39 = arith.constant 0 : i32
      %90 = tpu.memref_slice %arg4[%c0_i32_38, %c0_i32_39] : memref<40x256xf32, #tpu.memory_space<any>> -> memref<1x256xf32, #tpu.memory_space<any>>
      %c0_i32_40 = arith.constant 0 : i32
      %91 = tpu.memref_slice %arg8[%9, %84, %c0_i32_40] : memref<2x8x256xf32, #tpu.memory_space<vmem>> -> memref<1x1x256xf32, #tpu.memory_space<vmem>>
      %92 = tpu.memref_squeeze %91 : memref<1x1x256xf32, #tpu.memory_space<vmem>> -> memref<1x256xf32, #tpu.memory_space<vmem>>
      %93 = tpu.memref_slice %arg10[%c1_i32_37, %9] : memref<3x2x!tpu.dma_semaphore, #tpu.memory_space<semaphore_mem>> -> memref<1x1x!tpu.dma_semaphore, #tpu.memory_space<semaphore_mem>>
      %94 = tpu.memref_squeeze %93 : memref<1x1x!tpu.dma_semaphore, #tpu.memory_space<semaphore_mem>> -> memref<!tpu.dma_semaphore, #tpu.memory_space<semaphore_mem>>
      tpu.wait_dma2 semaphore(%94 : memref<!tpu.dma_semaphore, #tpu.memory_space<semaphore_mem>>) src(%90 : memref<1x256xf32, #tpu.memory_space<any>>) dst(%92 : memref<1x256xf32, #tpu.memory_space<vmem>>)
      %c2_i32_41 = arith.constant 2 : i32
      %c0_i32_42 = arith.constant 0 : i32
      %c0_i32_43 = arith.constant 0 : i32
      %95 = tpu.memref_slice %arg5[%c0_i32_42, %c0_i32_43] : memref<12x256xf32, #tpu.memory_space<any>> -> memref<1x256xf32, #tpu.memory_space<any>>
      %c0_i32_44 = arith.constant 0 : i32
      %96 = tpu.memref_slice %arg9[%9, %84, %c0_i32_44] : memref<2x8x256xf32, #tpu.memory_space<vmem>> -> memref<1x1x256xf32, #tpu.memory_space<vmem>>
      %97 = tpu.memref_squeeze %96 : memref<1x1x256xf32, #tpu.memory_space<vmem>> -> memref<1x256xf32, #tpu.memory_space<vmem>>
      %98 = tpu.memref_slice %arg10[%c2_i32_41, %9] : memref<3x2x!tpu.dma_semaphore, #tpu.memory_space<semaphore_mem>> -> memref<1x1x!tpu.dma_semaphore, #tpu.memory_space<semaphore_mem>>
      %99 = tpu.memref_squeeze %98 : memref<1x1x!tpu.dma_semaphore, #tpu.memory_space<semaphore_mem>> -> memref<!tpu.dma_semaphore, #tpu.memory_space<semaphore_mem>>
      tpu.wait_dma2 semaphore(%99 : memref<!tpu.dma_semaphore, #tpu.memory_space<semaphore_mem>>) src(%95 : memref<1x256xf32, #tpu.memory_space<any>>) dst(%97 : memref<1x256xf32, #tpu.memory_space<vmem>>)
    }
    %c1_i32_15 = arith.constant 1 : i32
    %22 = arith.addi %arg0, %c1_i32_15 : i32
    %c1_i32_16 = arith.constant 1 : i32
    %23 = arith.cmpi slt, %22, %c1_i32_16 : i32
    %24 = arith.extui %23 : i1 to i32
    %c0_i32_17 = arith.constant 0 : i32
    %25 = arith.cmpi ne, %24, %c0_i32_17 : i32
    scf.if %25 {
      %c1_i32_33 = arith.constant 1 : i32
      %83 = arith.addi %arg0, %c1_i32_33 : i32
      %c1_i32_34 = arith.constant 1 : i32
      %84 = arith.subi %c1_i32_34, %9 : i32
      %c8_i32_35 = arith.constant 8 : i32
      %85 = arith.muli %83, %c8_i32_35 : i32
      %c8_i32_36 = arith.constant 8 : i32
      %86 = arith.subi %c8_i32_36, %85 : i32
      %c8_i32_37 = arith.constant 8 : i32
      %87 = arith.minsi %c8_i32_37, %86 : i32
      %c0_i32_38 = arith.constant 0 : i32
      %88 = arith.subi %87, %c0_i32_38 : i32
      %c1_i32_39 = arith.constant 1 : i32
      %c1_i32_40 = arith.constant 1 : i32
      %89 = arith.subi %c1_i32_39, %c1_i32_40 : i32
      %90 = arith.addi %88, %89 : i32
      %c1_i32_41 = arith.constant 1 : i32
      %91 = arith.divsi %90, %c1_i32_41 : i32
      %c1_i32_42 = arith.constant 1 : i32
      %c0_i32_43 = arith.constant 0 : i32
      %c0_i32_44 = arith.constant 0 : i32
      %92 = arith.subi %91, %c0_i32_44 : i32
      %93 = arith.addi %c0_i32_44, %92 : i32
      %c1_i32_45 = arith.constant 1 : i32
      scf.for %arg11 = %c0_i32_44 to %93 step %c1_i32_45  : i32 {
        %94 = arith.muli %arg11, %c1_i32_42 : i32
        %95 = arith.addi %c0_i32_43, %94 : i32
        %96 = arith.addi %85, %95 : i32
        %97 = arith.index_cast %96 : i32 to index
        %98 = memref.load %arg1[%97] : memref<8xi32, #tpu.memory_space<smem>>
        %99 = arith.addi %85, %95 : i32
        %100 = arith.index_cast %99 : i32 to index
        %101 = memref.load %arg2[%100] : memref<8xi32, #tpu.memory_space<smem>>
        %102 = arith.addi %85, %95 : i32
        %103 = arith.index_cast %102 : i32 to index
        %104 = memref.load %arg3[%103] : memref<8xi32, #tpu.memory_space<smem>>
        %c0_i32_46 = arith.constant 0 : i32
        %c0_i32_47 = arith.constant 0 : i32
        %105 = tpu.memref_slice %arg4[%98, %c0_i32_47] : memref<40x256xf32, #tpu.memory_space<any>> -> memref<1x256xf32, #tpu.memory_space<any>>
        %c0_i32_48 = arith.constant 0 : i32
        %106 = tpu.memref_slice %arg7[%84, %95, %c0_i32_48] : memref<2x8x256xf32, #tpu.memory_space<vmem>> -> memref<1x1x256xf32, #tpu.memory_space<vmem>>
        %107 = tpu.memref_squeeze %106 : memref<1x1x256xf32, #tpu.memory_space<vmem>> -> memref<1x256xf32, #tpu.memory_space<vmem>>
        %108 = tpu.memref_slice %arg10[%c0_i32_46, %84] : memref<3x2x!tpu.dma_semaphore, #tpu.memory_space<semaphore_mem>> -> memref<1x1x!tpu.dma_semaphore, #tpu.memory_space<semaphore_mem>>
        %109 = tpu.memref_squeeze %108 : memref<1x1x!tpu.dma_semaphore, #tpu.memory_space<semaphore_mem>> -> memref<!tpu.dma_semaphore, #tpu.memory_space<semaphore_mem>>
        tpu.enqueue_dma source(%105 : memref<1x256xf32, #tpu.memory_space<any>>) target(%107 : memref<1x256xf32, #tpu.memory_space<vmem>>) target_semaphore(%109 : memref<!tpu.dma_semaphore, #tpu.memory_space<semaphore_mem>>)
        %c1_i32_49 = arith.constant 1 : i32
        %c0_i32_50 = arith.constant 0 : i32
        %110 = tpu.memref_slice %arg4[%101, %c0_i32_50] : memref<40x256xf32, #tpu.memory_space<any>> -> memref<1x256xf32, #tpu.memory_space<any>>
        %c0_i32_51 = arith.constant 0 : i32
        %111 = tpu.memref_slice %arg8[%84, %95, %c0_i32_51] : memref<2x8x256xf32, #tpu.memory_space<vmem>> -> memref<1x1x256xf32, #tpu.memory_space<vmem>>
        %112 = tpu.memref_squeeze %111 : memref<1x1x256xf32, #tpu.memory_space<vmem>> -> memref<1x256xf32, #tpu.memory_space<vmem>>
        %113 = tpu.memref_slice %arg10[%c1_i32_49, %84] : memref<3x2x!tpu.dma_semaphore, #tpu.memory_space<semaphore_mem>> -> memref<1x1x!tpu.dma_semaphore, #tpu.memory_space<semaphore_mem>>
        %114 = tpu.memref_squeeze %113 : memref<1x1x!tpu.dma_semaphore, #tpu.memory_space<semaphore_mem>> -> memref<!tpu.dma_semaphore, #tpu.memory_space<semaphore_mem>>
        tpu.enqueue_dma source(%110 : memref<1x256xf32, #tpu.memory_space<any>>) target(%112 : memref<1x256xf32, #tpu.memory_space<vmem>>) target_semaphore(%114 : memref<!tpu.dma_semaphore, #tpu.memory_space<semaphore_mem>>)
        %c2_i32_52 = arith.constant 2 : i32
        %c0_i32_53 = arith.constant 0 : i32
        %115 = tpu.memref_slice %arg5[%104, %c0_i32_53] : memref<12x256xf32, #tpu.memory_space<any>> -> memref<1x256xf32, #tpu.memory_space<any>>
        %c0_i32_54 = arith.constant 0 : i32
        %116 = tpu.memref_slice %arg9[%84, %95, %c0_i32_54] : memref<2x8x256xf32, #tpu.memory_space<vmem>> -> memref<1x1x256xf32, #tpu.memory_space<vmem>>
        %117 = tpu.memref_squeeze %116 : memref<1x1x256xf32, #tpu.memory_space<vmem>> -> memref<1x256xf32, #tpu.memory_space<vmem>>
        %118 = tpu.memref_slice %arg10[%c2_i32_52, %84] : memref<3x2x!tpu.dma_semaphore, #tpu.memory_space<semaphore_mem>> -> memref<1x1x!tpu.dma_semaphore, #tpu.memory_space<semaphore_mem>>
        %119 = tpu.memref_squeeze %118 : memref<1x1x!tpu.dma_semaphore, #tpu.memory_space<semaphore_mem>> -> memref<!tpu.dma_semaphore, #tpu.memory_space<semaphore_mem>>
        tpu.enqueue_dma source(%115 : memref<1x256xf32, #tpu.memory_space<any>>) target(%117 : memref<1x256xf32, #tpu.memory_space<vmem>>) target_semaphore(%119 : memref<!tpu.dma_semaphore, #tpu.memory_space<semaphore_mem>>)
      }
    } else {
    }
    %26 = arith.index_cast %9 : i32 to index
    %c0 = arith.constant 0 : index
    %c0_18 = arith.constant 0 : index
    %27 = vector.load %arg7[%26, %c0, %c0_18] : memref<2x8x256xf32, #tpu.memory_space<vmem>>, vector<1x8x256xf32>
    %28 = vector.shape_cast %27 : vector<1x8x256xf32> to vector<8x256xf32>
    %29 = arith.index_cast %9 : i32 to index
    %c0_19 = arith.constant 0 : index
    %c0_20 = arith.constant 0 : index
    %30 = vector.load %arg8[%29, %c0_19, %c0_20] : memref<2x8x256xf32, #tpu.memory_space<vmem>>, vector<1x8x256xf32>
    %31 = vector.shape_cast %30 : vector<1x8x256xf32> to vector<8x256xf32>
    %32 = arith.index_cast %9 : i32 to index
    %c0_21 = arith.constant 0 : index
    %c0_22 = arith.constant 0 : index
    %33 = vector.load %arg9[%32, %c0_21, %c0_22] : memref<2x8x256xf32, #tpu.memory_space<vmem>>, vector<1x8x256xf32>
    %34 = vector.shape_cast %33 : vector<1x8x256xf32> to vector<8x256xf32>
    %35 = vector.extract_strided_slice %28 {offsets = [0, 0], sizes = [8, 128], strides = [1, 1]} : vector<8x256xf32> to vector<8x128xf32>
    %36 = vector.extract_strided_slice %28 {offsets = [0, 128], sizes = [8, 128], strides = [1, 1]} : vector<8x256xf32> to vector<8x128xf32>
    %37 = vector.extract_strided_slice %31 {offsets = [0, 0], sizes = [8, 128], strides = [1, 1]} : vector<8x256xf32> to vector<8x128xf32>
    %38 = vector.extract_strided_slice %31 {offsets = [0, 128], sizes = [8, 128], strides = [1, 1]} : vector<8x256xf32> to vector<8x128xf32>
    %39 = vector.extract_strided_slice %34 {offsets = [0, 0], sizes = [8, 128], strides = [1, 1]} : vector<8x256xf32> to vector<8x128xf32>
    %40 = vector.extract_strided_slice %34 {offsets = [0, 128], sizes = [8, 128], strides = [1, 1]} : vector<8x256xf32> to vector<8x128xf32>
    %41 = arith.mulf %35, %36 : vector<8x128xf32>
    %cst = arith.constant dense<0.000000e+00> : vector<8xf32>
    %42 = vector.multi_reduction <add>, %41, %cst [1] : vector<8x128xf32> to vector<8xf32>
    %43 = vector.shape_cast %42 : vector<8xf32> to vector<8x1xf32>
    %44 = vector.broadcast %43 : vector<8x1xf32> to vector<8x128xf32>
    %45 = arith.mulf %44, %40 : vector<8x128xf32>
    %46 = arith.addf %35, %45 : vector<8x128xf32>
    %47 = arith.mulf %46, %46 : vector<8x128xf32>
    %cst_23 = arith.constant dense<0.000000e+00> : vector<8xf32>
    %48 = vector.multi_reduction <add>, %47, %cst_23 [1] : vector<8x128xf32> to vector<8xf32>
    %49 = vector.shape_cast %48 : vector<8xf32> to vector<8x1xf32>
    %cst_24 = arith.constant 1.000000e-24 : f32
    %50 = vector.broadcast %cst_24 : f32 to vector<8x1xf32>
    %51 = arith.maximumf %49, %50 : vector<8x1xf32>
    %52 = math.rsqrt %51 : vector<8x1xf32>
    %53 = vector.broadcast %52 : vector<8x1xf32> to vector<8x128xf32>
    %54 = arith.mulf %46, %53 : vector<8x128xf32>
    %55 = arith.mulf %37, %38 : vector<8x128xf32>
    %cst_25 = arith.constant dense<0.000000e+00> : vector<8xf32>
    %56 = vector.multi_reduction <add>, %55, %cst_25 [1] : vector<8x128xf32> to vector<8xf32>
    %57 = vector.shape_cast %56 : vector<8xf32> to vector<8x1xf32>
    %58 = vector.broadcast %57 : vector<8x1xf32> to vector<8x128xf32>
    %59 = arith.mulf %58, %40 : vector<8x128xf32>
    %60 = arith.addf %37, %59 : vector<8x128xf32>
    %61 = arith.mulf %60, %60 : vector<8x128xf32>
    %cst_26 = arith.constant dense<0.000000e+00> : vector<8xf32>
    %62 = vector.multi_reduction <add>, %61, %cst_26 [1] : vector<8x128xf32> to vector<8xf32>
    %63 = vector.shape_cast %62 : vector<8xf32> to vector<8x1xf32>
    %cst_27 = arith.constant 1.000000e-24 : f32
    %64 = vector.broadcast %cst_27 : f32 to vector<8x1xf32>
    %65 = arith.maximumf %63, %64 : vector<8x1xf32>
    %66 = math.rsqrt %65 : vector<8x1xf32>
    %67 = vector.broadcast %66 : vector<8x1xf32> to vector<8x128xf32>
    %68 = arith.mulf %60, %67 : vector<8x128xf32>
    %69 = arith.mulf %39, %39 : vector<8x128xf32>
    %cst_28 = arith.constant dense<0.000000e+00> : vector<8xf32>
    %70 = vector.multi_reduction <add>, %69, %cst_28 [1] : vector<8x128xf32> to vector<8xf32>
    %71 = vector.shape_cast %70 : vector<8xf32> to vector<8x1xf32>
    %cst_29 = arith.constant 1.000000e-24 : f32
    %72 = vector.broadcast %cst_29 : f32 to vector<8x1xf32>
    %73 = arith.maximumf %71, %72 : vector<8x1xf32>
    %74 = math.rsqrt %73 : vector<8x1xf32>
    %75 = vector.broadcast %74 : vector<8x1xf32> to vector<8x128xf32>
    %76 = arith.mulf %39, %75 : vector<8x128xf32>
    %77 = arith.addf %54, %76 : vector<8x128xf32>
    %78 = arith.subf %77, %68 : vector<8x128xf32>
    %79 = math.absf %78 : vector<8x128xf32>
    %cst_30 = arith.constant dense<0.000000e+00> : vector<8xf32>
    %80 = vector.multi_reduction <add>, %79, %cst_30 [1] : vector<8x128xf32> to vector<8xf32>
    %81 = vector.shape_cast %80 : vector<8xf32> to vector<8x1xf32>
    %c0_31 = arith.constant 0 : index
    %c0_32 = arith.constant 0 : index
    %82 = vector.load %arg6[%c0_31, %c0_32] : memref<8x1xf32, #tpu.memory_space<vmem>>, vector<8x1xf32>
    tpu.vector_store %arg6[%c0_31, %c0_32], %81 {strides = array<i32>} : memref<8x1xf32, #tpu.memory_space<vmem>>, vector<8x1xf32>,
    return
  }
  func.func @transform_2(%arg0: i32, %arg1: memref<8xi32, #tpu.memory_space<smem>>, %arg2: memref<8xi32, #tpu.memory_space<smem>>, %arg3: memref<8xi32, #tpu.memory_space<smem>>) -> (i32, i32) {
    %c0_i32 = arith.constant 0 : i32
    %c0_i32_0 = arith.constant 0 : i32
    return %arg0, %c0_i32 : i32, i32
  }
}

</mosaic_0001>

<llo_original>
// kernel: tpu_custom_call.1
$region0: #{tpu_custom_call.1}
  #allocation0 [shape = 'u32[]', space=smem, size = 0x4, offset = 0x4, fixed_abs, tag = 'smem constant byte address 0x4 - core index']
  #allocation1 [shape = 'u32[72,128]{1,0:T(1,128)}', space=vmem, size = 0x9000, scoped, tag = 'internal scratch']
  #allocation2 [shape = 'f32[2,8,256]{2,1,0:T(8,128)}', space=vmem, size = 0x4000, scoped, tag = 'scratch operand']
  #allocation3 [shape = 'f32[2,8,256]{2,1,0:T(8,128)}', space=vmem, size = 0x4000, scoped, tag = 'scratch operand']
  #allocation4 [shape = 'f32[2,8,256]{2,1,0:T(8,128)}', space=vmem, size = 0x4000, scoped, tag = 'scratch operand']
  #allocation5 [shape = 's32[6]{0}', space=sflag, size = 0x18, scoped, tag = 'scratch operand']
  #allocation6 [shape = 's32[1]{0}', space=sflag, size = 0x4, scoped, tag = 'scoped memory for tpu_custom_call.1']
  #allocation7 [shape = 'u8[512]{0}', space=smem, size = 0x200, scoped, tag = 'prefetched SMEM operand 0']
  #allocation8 [shape = 'u8[512]{0}', space=smem, size = 0x200, scoped, tag = 'prefetched SMEM operand 1']
  #allocation9 [shape = 'u8[512]{0}', space=smem, size = 0x200, scoped, tag = 'prefetched SMEM operand 2']
  #allocation10 [shape = 's32[]', space=sflag, size = 0x4, offset = 0, fixed_abs, tag = 'sflag constant byte address 0x0 - dummy sync flag']
  #allocation11 [shape = 's32[]', space=sflag, size = 0x4, offset = 0, fixed_abs, tag = 'sflag constant byte address 0x0 - dummy sync flag']
  #allocation12 [shape = 's32[]', space=sflag, size = 0x4, offset = 0, fixed_abs, tag = 'sflag constant byte address 0x0 - dummy sync flag']
  #allocation13 [shape = 's32[]', space=sflag, size = 0x4, offset = 0, fixed_abs, tag = 'sflag constant byte address 0x0 - dummy sync flag']
  #allocation14 [shape = 's32[]', space=sflag, size = 0x4, offset = 0, fixed_abs, tag = 'sflag constant byte address 0x0 - dummy sync flag']
  #allocation15 [shape = 's32[]', space=sflag, size = 0x4, offset = 0, fixed_abs, tag = 'sflag constant byte address 0x0 - dummy sync flag']
  %s0 = inlined_call_operand.hbm [shape: s32[8], index: 0, kind: input, shape index: {}]
  %s1 = inlined_call_operand.hbm [shape: s32[8], index: 1, kind: input, shape index: {}]
  %s2 = inlined_call_operand.vmem [shape: s32[8], index: 2, kind: input, shape index: {}]
  %s3 = inlined_call_operand.hbm [shape: f32[40,256], index: 3, kind: input, shape index: {}]
  %s4 = inlined_call_operand.hbm [shape: f32[12,256], index: 4, kind: input, shape index: {}]
  %s5 = inlined_call_operand.vmem [shape: f32[8,1], index: 5, kind: output, shape index: {}]
  %s6 = sld [smem:[#allocation0]]
  $region39: #{tpu_custom_call.1} parent=0
    _
  %s8 = ssub.s32 1, %s6
  %s9 = scalar_select 0, %s8, %s6
  %s11 = sshll.u32 %s0, 4
  %s12 = int_to_ptr.hbm [resolvable:$true] %s11
  %14 = dma.hbm_to_smem %s12, 16, [#allocation7], [#allocation6]
  %s16 = sshll.u32 %s1, 4
  %s17 = int_to_ptr.hbm [resolvable:$true] %s16
  %19 = dma.hbm_to_smem %s17, 16, [#allocation8], [#allocation6]
  %s21 = sshll.u32 %s2, 4
  %s22 = int_to_ptr.vmem [resolvable:$true] %s21
  %24 = dma.vmem_to_smem %s22, 16, [#allocation9], [#allocation6]
  %26 = dma.done [#allocation6], 48
  %27 = sfence
  %s28 = ssub.s32 0, 0
  %s29 = ssub.s32 0, 0
  %p30 = scmp.ne.s32.totalorder 0, 0
  %p31 = scmp.lt.s32.totalorder 0, 0
  %p32 = pnand %p31, %p30
  %p33 = pneg %p32
  %s34 = sadd.s32 0, 2
  %s35 = scalar_select %p33, %s34, 0
  %p36 = scmp.eq.s32.totalorder 0, 0
  // Predicated region
  $region2: #{tpu_custom_call.1} parent=0 // pred_check
    %p37 = pneg %p36
  $region3: #{tpu_custom_call.1} parent=0 // pred_check_branch
    %39 = sbr.rel (%p37) target = $region5
  $region4: #{tpu_custom_call.1} parent=0 // pred_region
    loop: start=0, step=1, limit=8
    $region6: #{tpu_custom_call.1} parent=4 // loop_pre_header
      _
    $region7: #{tpu_custom_call.1} parent=4 // loop_header
      %s41 = sphi 0, %s45
      %p42 = scmp.ge.s32.totalorder %s41, 8
    $region8: #{tpu_custom_call.1} parent=4 // loop_header_branch
      %44 = sbr.rel (%p42) target = $region12
    $region9: #{tpu_custom_call.1} parent=4 // loop_body
      %s46 = sld [smem:[#allocation7 + %s41]]
      %s47 = sld [smem:[#allocation8 + %s41]]
      %s48 = sld [smem:[#allocation9 + %s41]]
      %s49 = sshrl.u32 %s46, 3
      %s50 = sand.u32 %s46, 7
      %s51 = smul.u32 %s49, 16
      %s52 = sadd.s32 %s50, %s51
      %s53 = scalar_lea.hbm %s3, %s52
      %s54 = sshrl.u32 %s41, 3
      %s55 = sand.u32 %s41, 7
      %s56 = smul.u32 %s54, 16
      %s57 = sadd.s32 %s55, %s56
      %s58 = smul.u32 %s35, 16
      %s59 = sadd.s32 %s57, %s58
      %s60 = scalar_lea.vmem [#allocation2], %s59
      %s61 = scalar_lea.sflag [#allocation5], %s35
      %s62 = sshll.u32 %s53, 4
      %s63 = int_to_ptr.hbm [resolvable:$true] %s62
      %s64 = sshll.u32 %s60, 4
      %s65 = int_to_ptr.vmem [resolvable:$true] %s64
      %69 = dma.hbm_to_vmem [thread:$0]  %s63, 32, %s65, %s61, 128, 128, 1
      %s70 = sshrl.u32 %s47, 3
      %s71 = sand.u32 %s47, 7
      %s72 = smul.u32 %s70, 16
      %s73 = sadd.s32 %s71, %s72
      %s74 = scalar_lea.hbm %s3, %s73
      %s75 = scalar_lea.vmem [#allocation3], %s59
      %s76 = sadd.s32 %s35, 2
      %s77 = scalar_lea.sflag [#allocation5], %s76
      %s78 = sshll.u32 %s74, 4
      %s79 = int_to_ptr.hbm [resolvable:$true] %s78
      %s80 = sshll.u32 %s75, 4
      %s81 = int_to_ptr.vmem [resolvable:$true] %s80
      %85 = dma.hbm_to_vmem [thread:$0]  %s79, 32, %s81, %s77, 128, 128, 1
      %s86 = sshrl.u32 %s48, 3
      %s87 = sand.u32 %s48, 7
      %s88 = smul.u32 %s86, 16
      %s89 = sadd.s32 %s87, %s88
      %s90 = scalar_lea.hbm %s4, %s89
      %s91 = scalar_lea.vmem [#allocation4], %s59
      %s92 = sadd.s32 %s35, 4
      %s93 = scalar_lea.sflag [#allocation5], %s92
      %s94 = sshll.u32 %s90, 4
      %s95 = int_to_ptr.hbm [resolvable:$true] %s94
      %s96 = sshll.u32 %s91, 4
      %s97 = int_to_ptr.vmem [resolvable:$true] %s96
      %101 = dma.hbm_to_vmem [thread:$0]  %s95, 32, %s97, %s93, 128, 128, 1
    $region10: #{tpu_custom_call.1} parent=4 // loop_footer
      %s45 = sadd.s32 1, %s41
    $region11: #{tpu_custom_call.1} parent=4 // loop_footer_branch
      %40 = sbr.rel target = $region7
    $region12: #{tpu_custom_call.1} parent=4 // loop_exit
      _
  $region5: #{tpu_custom_call.1} parent=0 // pred_fallthru
    _
  %s102 = smul.u32 0, 8
  %s103 = ssub.s32 8, %s102
  %p104 = scmp.lt.s32.totalorder %s103, 8
  %s105 = scalar_select %p104, %s103, 8
  // While loop
  $region13: #{tpu_custom_call.1} parent=0 // loop_pre_header
    _
  $region14: #{tpu_custom_call.1} parent=0 // loop_header
    %s107 = sphi 0, %s109
    %p108 = scmp.ge.s32.totalorder %s107, %s105
  $region15: #{tpu_custom_call.1} parent=0 // loop_header_branch
    %111 = sbr.rel (%p108) target = $region19
  $region16: #{tpu_custom_call.1} parent=0 // loop_body
    %s112 = scalar_lea.sflag [#allocation5], %s35
    %s113 = smul.u32 1, 2
    %s114 = sshll.u32 %s113, 4
    %115 = dma.done %s112, %s114
    %s116 = sadd.s32 %s35, 2
    %s117 = scalar_lea.sflag [#allocation5], %s116
    %s118 = sshll.u32 %s113, 4
    %119 = dma.done %s117, %s118
    %s120 = sadd.s32 %s35, 4
    %s121 = scalar_lea.sflag [#allocation5], %s120
    %s122 = sshll.u32 %s113, 4
    %123 = dma.done %s121, %s122
  $region17: #{tpu_custom_call.1} parent=0 // loop_footer
    %s109 = sadd.s32 %s107, 1
  $region18: #{tpu_custom_call.1} parent=0 // loop_footer_branch
    %106 = sbr.rel target = $region14
  $region19: #{tpu_custom_call.1} parent=0 // loop_exit
    _
  %s124 = sadd.s32 0, 1
  %p125 = scmp.lt.s32.totalorder %s124, 1
  // Predicated region
  $region20: #{tpu_custom_call.1} parent=0 // pred_check
    %p126 = pneg %p125
  $region21: #{tpu_custom_call.1} parent=0 // pred_check_branch
    %128 = sbr.rel (%p126) target = $region23
  $region22: #{tpu_custom_call.1} parent=0 // pred_region
    %s129 = ssub.s32 1, %s35
    %s130 = smul.u32 %s124, 8
    %s131 = ssub.s32 8, %s130
    %p132 = scmp.lt.s32.totalorder %s131, 8
    %s133 = scalar_select %p132, %s131, 8
    // While loop
    $region24: #{tpu_custom_call.1} parent=22 // loop_pre_header
      _
    $region25: #{tpu_custom_call.1} parent=22 // loop_header
      %s135 = sphi 0, %s137
      %p136 = scmp.ge.s32.totalorder %s135, %s133
    $region26: #{tpu_custom_call.1} parent=22 // loop_header_branch
      %139 = sbr.rel (%p136) target = $region30
    $region27: #{tpu_custom_call.1} parent=22 // loop_body
      %s140 = sadd.s32 %s130, %s135
      %s141 = sld [smem:[#allocation7 + %s140]]
      %s142 = sld [smem:[#allocation8 + %s140]]
      %s143 = sld [smem:[#allocation9 + %s140]]
      %s144 = sshrl.u32 %s141, 3
      %s145 = sand.u32 %s141, 7
      %s146 = smul.u32 %s144, 16
      %s147 = sadd.s32 %s145, %s146
      %s148 = scalar_lea.hbm %s3, %s147
      %s149 = sshrl.u32 %s135, 3
      %s150 = sand.u32 %s135, 7
      %s151 = smul.u32 %s149, 16
      %s152 = sadd.s32 %s150, %s151
      %s153 = smul.u32 %s129, 16
      %s154 = sadd.s32 %s152, %s153
      %s155 = scalar_lea.vmem [#allocation2], %s154
      %s156 = scalar_lea.sflag [#allocation5], %s129
      %s157 = sshll.u32 %s148, 4
      %s158 = int_to_ptr.hbm [resolvable:$true] %s157
      %s159 = sshll.u32 %s155, 4
      %s160 = int_to_ptr.vmem [resolvable:$true] %s159
      %164 = dma.hbm_to_vmem [thread:$0]  %s158, 32, %s160, %s156, 128, 128, 1
      %s165 = sshrl.u32 %s142, 3
      %s166 = sand.u32 %s142, 7
      %s167 = smul.u32 %s165, 16
      %s168 = sadd.s32 %s166, %s167
      %s169 = scalar_lea.hbm %s3, %s168
      %s170 = scalar_lea.vmem [#allocation3], %s154
      %s171 = sadd.s32 %s129, 2
      %s172 = scalar_lea.sflag [#allocation5], %s171
      %s173 = sshll.u32 %s169, 4
      %s174 = int_to_ptr.hbm [resolvable:$true] %s173
      %s175 = sshll.u32 %s170, 4
      %s176 = int_to_ptr.vmem [resolvable:$true] %s175
      %180 = dma.hbm_to_vmem [thread:$0]  %s174, 32, %s176, %s172, 128, 128, 1
      %s181 = sshrl.u32 %s143, 3
      %s182 = sand.u32 %s143, 7
      %s183 = smul.u32 %s181, 16
      %s184 = sadd.s32 %s182, %s183
      %s185 = scalar_lea.hbm %s4, %s184
      %s186 = scalar_lea.vmem [#allocation4], %s154
      %s187 = sadd.s32 %s129, 4
      %s188 = scalar_lea.sflag [#allocation5], %s187
      %s189 = sshll.u32 %s185, 4
      %s190 = int_to_ptr.hbm [resolvable:$true] %s189
      %s191 = sshll.u32 %s186, 4
      %s192 = int_to_ptr.vmem [resolvable:$true] %s191
      %196 = dma.hbm_to_vmem [thread:$0]  %s190, 32, %s192, %s188, 128, 128, 1
    $region28: #{tpu_custom_call.1} parent=22 // loop_footer
      %s137 = sadd.s32 %s135, 1
    $region29: #{tpu_custom_call.1} parent=22 // loop_footer_branch
      %134 = sbr.rel target = $region25
    $region30: #{tpu_custom_call.1} parent=22 // loop_exit
      _
  $region23: #{tpu_custom_call.1} parent=0 // pred_fallthru
    _
  %s197 = smul.u32 %s35, 2
  %s198 = smul.addr %s197, 8
  %s199 = scalar_lea.vmem [#allocation2], %s198
  %v200 = vld [vmem:[%s199] sm:$0xff]
  %v201 = vld [vmem:[%s199 + $0x8] sm:$0xff]
  %s202 = smul.addr %s197, 8
  %s203 = scalar_lea.vmem [#allocation3], %s202
  %v204 = vld [vmem:[%s203] sm:$0xff]
  %v205 = vld [vmem:[%s203 + $0x8] sm:$0xff]
  %s206 = smul.addr %s197, 8
  %s207 = scalar_lea.vmem [#allocation4], %s206
  %v208 = vld [vmem:[%s207] sm:$0xff]
  %v209 = vld [vmem:[%s207 + $0x8] sm:$0xff]
  %v210 = vmul.f32 %v200, %v201
  %211 = vadd.xlane.f32.xlu0 %v210
  %v212 = vpop.xlane.xlu0 %211
  %v213 = vmul.f32 %v212, %v209
  %v214 = vadd.f32 %v200, %v213
  %v215 = vmul.f32 %v214, %v214
  %216 = vadd.xlane.f32.xlu0 %v215
  %v217 = vpop.xlane.xlu0 %216
  %v218 = vmax.f32 %v217, 1e-24
  %v219 = vrsqrt.pop %v218
  %v220 = vmul.f32 %v219, %v218
  %v221 = vmul.f32 %v220, %v219
  %v222 = vmul.f32 0.5, %v221
  %v223 = vsub.f32 1.5, %v222
  %v224 = vmul.f32 %v219, %v223
  %vm225 = vweird.f32 %v218
  %vm226 = vweird.f32 %v219
  %vm227 = vmor %vm225, %vm226
  %v228 = vsel %vm227, %v219, %v224
  %v229 = vmul.f32 %v214, %v228
  %v230 = vmul.f32 %v204, %v205
  %231 = vadd.xlane.f32.xlu0 %v230
  %v232 = vpop.xlane.xlu0 %231
  %v233 = vmul.f32 %v232, %v209
  %v234 = vadd.f32 %v204, %v233
  %v235 = vmul.f32 %v234, %v234
  %236 = vadd.xlane.f32.xlu0 %v235
  %v237 = vpop.xlane.xlu0 %236
  %v238 = vmax.f32 %v237, 1e-24
  %v239 = vrsqrt.pop %v238
  %v240 = vmul.f32 %v239, %v238
  %v241 = vmul.f32 %v240, %v239
  %v242 = vmul.f32 0.5, %v241
  %v243 = vsub.f32 1.5, %v242
  %v244 = vmul.f32 %v239, %v243
  %vm245 = vweird.f32 %v238
  %vm246 = vweird.f32 %v239
  %vm247 = vmor %vm245, %vm246
  %v248 = vsel %vm247, %v239, %v244
  %v249 = vmul.f32 %v234, %v248
  %v250 = vmul.f32 %v208, %v208
  %251 = vadd.xlane.f32.xlu0 %v250
  %v252 = vpop.xlane.xlu0 %251
  %v253 = vmax.f32 %v252, 1e-24
  %v254 = vrsqrt.pop %v253
  %v255 = vmul.f32 %v254, %v253
  %v256 = vmul.f32 %v255, %v254
  %v257 = vmul.f32 0.5, %v256
  %v258 = vsub.f32 1.5, %v257
  %v259 = vmul.f32 %v254, %v258
  %vm260 = vweird.f32 %v253
  %vm261 = vweird.f32 %v254
  %vm262 = vmor %vm260, %vm261
  %v263 = vsel %vm262, %v254, %v259
  %v264 = vmul.f32 %v208, %v263
  %v265 = vadd.f32 %v229, %v264
  %v266 = vsub.f32 %v265, %v249
  %v267 = vand.u32 2147483647, %v266
  %268 = vadd.xlane.f32.xlu0 %v267
  %v269 = vpop.xlane.xlu0 %268
  %vm270 = vcmask 7168
  %271 = vst.msk [vmem:[%s5] sm:$0xff] %vm270, %v269
  // Predicated region
  $region31: #{tpu_custom_call.1} parent=0 // pred_check
    _
  $region32: #{tpu_custom_call.1} parent=0 // pred_check_branch
    %273 = sbr.rel (0) target = $region34
  $region33: #{tpu_custom_call.1} parent=0 // pred_region
    _
  $region34: #{tpu_custom_call.1} parent=0 // pred_fallthru
    _
  // Predicated region
  $region35: #{tpu_custom_call.1} parent=0 // pred_check
    _
  $region36: #{tpu_custom_call.1} parent=0 // pred_check_branch
    %275 = sbr.rel (0) target = $region38
  $region37: #{tpu_custom_call.1} parent=0 // pred_region
    _
  $region38: #{tpu_custom_call.1} parent=0 // pred_fallthru
    _
  %276 = vsyncmov [#allocation5]
  %s277 = vpop.sfrf %276
  %p278 = scmp.eq.s32.totalorder %s277, 0
  %p279 = pneg %p278
  %281 = shalt.err (%p279)
  %s282 = scalar_lea.sflag [#allocation5], 1
  %283 = vsyncmov %s282
  %s284 = vpop.sfrf %283
  %p285 = scmp.eq.s32.totalorder %s284, 0
  %p286 = pneg %p285
  %288 = shalt.err (%p286)
  %s289 = scalar_lea.sflag [#allocation5], 2
  %290 = vsyncmov %s289
  %s291 = vpop.sfrf %290
  %p292 = scmp.eq.s32.totalorder %s291, 0
  %p293 = pneg %p292
  %295 = shalt.err (%p293)
  %s296 = scalar_lea.sflag [#allocation5], 3
  %297 = vsyncmov %s296
  %s298 = vpop.sfrf %297
  %p299 = scmp.eq.s32.totalorder %s298, 0
  %p300 = pneg %p299
  %302 = shalt.err (%p300)
  %s303 = scalar_lea.sflag [#allocation5], 4
  %304 = vsyncmov %s303
  %s305 = vpop.sfrf %304
  %p306 = scmp.eq.s32.totalorder %s305, 0
  %p307 = pneg %p306
  %309 = shalt.err (%p307)
  %s310 = scalar_lea.sflag [#allocation5], 5
  %311 = vsyncmov %s310
  %s312 = vpop.sfrf %311
  %p313 = scmp.eq.s32.totalorder %s312, 0
  %p314 = pneg %p313
  %316 = shalt.err (%p314)

</llo_original>
